<compile_context>
chip_gen: v5e
topology: v5e:2x2
jax: 0.10.0
libtpu: 0.0.40
codegen_flags: <defaults>
</compile_context>

<pallas_src>
import functools
import math

import jax
import jax.numpy as jnp
from jax.experimental import pallas as pl
from jax.experimental.pallas import tpu as pltpu


def _round_up(n, m):
    return ((n + m - 1) // m) * m


def _mlp_kernel(x_ref, w1_ref, b1_ref, w2_ref, b2_ref, o_ref, acc_ref):
    j = pl.program_id(1)                      # hidden (mid) tile index

    @pl.when(j == 0)
    def _():
        acc_ref[...] = jnp.zeros_like(acc_ref)

    # First linear (MXU) -> bias + ReLU (VPU), f32 math.
    h = jnp.dot(x_ref[...].astype(w1_ref.dtype), w1_ref[...],
                preferred_element_type=jnp.float32)
    h = jnp.maximum(h + b1_ref[...].astype(jnp.float32), 0.0)
    # Second linear (MXU): cast h to the weight dtype so bf16 weights stay on the bf16 MXU
    # path; accumulation stays f32 via preferred_element_type + the f32 scratch.
    acc_ref[...] += jnp.dot(h.astype(w2_ref.dtype), w2_ref[...],
                            preferred_element_type=jnp.float32)

    @pl.when(j == pl.num_programs(1) - 1)
    def _():
        o_ref[...] = (acc_ref[...] + b2_ref[...].astype(jnp.float32)).astype(o_ref.dtype)
    # TODO(synk): dropout_r > 0 path (training-mode nn.Dropout) not implemented; the module
    # defaults to dropout_r=0, so forward semantics here match the eval/default path.


def _vmem_capacity_bytes():
    # Chip-aware VMEM capacity (128 MiB on v5e/v6e, 64 MiB/TC on v7x). Fall back to the
    # smallest known capacity if the query is unavailable.
    try:
        cap = int(pltpu.get_tpu_info().vmem_capacity_bytes)
        if cap > 0:
            return cap
    except Exception:
        pass
    return 64 * 1024 * 1024


def pad_mlp_params(w1, b1, w2, b2):
    """One-time padding of parameters to 128-lane multiples (keeps weight padding out of the
    per-call hot path). No-ops when dims are already aligned."""
    in_size, mid_size = w1.shape
    out_size = w2.shape[1]
    in_p, mid_p, out_p = (_round_up(s, 128) for s in (in_size, mid_size, out_size))

    def p(a, rpad, cpad):
        return a if (rpad == 0 and cpad == 0) else jnp.pad(a, ((0, rpad), (0, cpad)))

    return (p(w1, in_p - in_size, mid_p - mid_size),
            p(b1, 0, mid_p - mid_size),
            p(w2, mid_p - mid_size, out_p - out_size),
            p(b2, 0, out_p - out_size))


def mlp_forward(x, w1p, b1p, w2p, b2p, *, out_size, row_tile=None):
    """x: [..., in_size] -> [..., out_size]. w1p/b1p/w2p/b2p must be pre-padded to 128-lane
    multiples (see pad_mlp_params); only x is padded per call."""
    in_size = x.shape[-1]
    in_p, mid_p = w1p.shape
    out_p = w2p.shape[1]
    lead = x.shape[:-1]
    rows = int(math.prod(lead)) if lead else 1

    dt = x.dtype
    x_isz = dt.itemsize
    w_isz = w1p.dtype.itemsize
    sub = {4: 8, 2: 16, 1: 32}.get(x_isz, 8)   # sublane packing per dtype width

    cap = _vmem_capacity_bytes()
    budget = int(0.85 * cap)                   # headroom for compiler temporaries

    def needed(row_t, mid_t):
        n_mid = mid_p // mid_t
        wbuf = 1 if n_mid == 1 else 2          # resident weights -> single buffer
        xio = 2 * row_t * (in_p + out_p) * x_isz          # double-buffered x / out tiles
        wts = wbuf * (in_p * mid_t + mid_t * out_p + mid_t) * w_isz + out_p * w_isz
        acc = row_t * out_p * 4                           # f32 accumulator scratch
        hid = row_t * mid_t * 4                           # f32 hidden intermediate
        return xio + wts + acc + hid

    # ---- row-tile candidates: MXU-M friendly, >=2 grid steps when there is enough work ---
    max_row = _round_up(rows, sub)
    if rows >= 2 * sub:
        max_row = min(max_row, _round_up(-(-rows // 2), sub))
    if row_tile is not None:
        row_cands = [_round_up(min(row_tile, max_row), sub)]
    else:
        row_cands = [t for t in (512, 256, 128, 64, 32, 16, 8)
                     if t % sub == 0 and t <= max_row]
        if not row_cands:
            row_cands = [max_row]
    mid_cands = [t for t in range(mid_p, 0, -128) if mid_p % t == 0]

    # Prefer whole-weight residency (no weight re-DMA across row tiles); within that, pick
    # the largest row tile that fits the chip's VMEM budget.
    row_t, mid_t = row_cands[-1], mid_cands[-1]
    done = False
    for mt in mid_cands:
        for rt in row_cands:
            if needed(rt, mt) <= budget:
                row_t, mid_t, done = rt, mt, True
                break
        if done:
            break

    n_mid = mid_p // mid_t
    resident = n_mid == 1
    rows_grid = -(-rows // row_t)
    rows_p = rows_grid * row_t
    grid = (rows_grid, n_mid)

    x2d = x.reshape(rows, in_size)
    if rows_p != rows or in_p != in_size:
        x2d = jnp.pad(x2d, ((0, rows_p - rows), (0, in_p - in_size)))

    vmem_limit = int(min(max(needed(row_t, mid_t) + (8 << 20), 32 << 20), budget))

    refetch = 1 if resident else rows_grid
    cost = pl.CostEstimate(
        flops=2 * rows_p * mid_p * (in_p + out_p),
        transcendentals=0,
        bytes_accessed=rows_p * (in_p + out_p) * x_isz
        + refetch * (in_p * mid_p + mid_p + mid_p * out_p + out_p) * w_isz,
    )

    def wspec(shape, index_map):
        # Grid-invariant (resident) weights: single VMEM buffer instead of the default
        # (never-used) double buffer. Tiled weights keep double buffering for pipelining.
        if resident:
            return pl.BlockSpec(shape, index_map, pipeline_mode=pl.Buffered(1))
        return pl.BlockSpec(shape, index_map)

    out = pl.pallas_call(
        _mlp_kernel,
        out_shape=jax.ShapeDtypeStruct((rows_p, out_p), dt),
        grid_spec=pltpu.PrefetchScalarGridSpec(
            num_scalar_prefetch=0,
            grid=grid,
            in_specs=[
                pl.BlockSpec((row_t, in_p), lambda i, j: (i, 0)),     # x tile (pipelined)
                wspec((in_p, mid_t), lambda i, j: (0, j)),            # W1 column block
                wspec((1, mid_t), lambda i, j: (0, j)),               # b1 block
                wspec((mid_t, out_p), lambda i, j: (j, 0)),           # W2 row block
                pl.BlockSpec((1, out_p), lambda i, j: (0, 0),
                             pipeline_mode=pl.Buffered(1)),           # b2 (always resident)
            ],
            out_specs=pl.BlockSpec((row_t, out_p), lambda i, j: (i, 0)),
            scratch_shapes=[pltpu.VMEM((row_t, out_p), jnp.float32)],
        ),
        compiler_params=pltpu.CompilerParams(
            dimension_semantics=("parallel", "arbitrary"),  # rows shard across TCs (v7x)
            vmem_limit_bytes=vmem_limit,
        ),
        cost_estimate=cost,
    )(x2d, w1p, b1p, w2p, b2p)

    return out[:rows, :out_size].reshape(*lead, out_size)


def init_mlp_params(key, in_size, mid_size, out_size, dtype=jnp.float32):
    """Deterministic init mirroring nn.Linear default: U(-1/sqrt(fan_in), 1/sqrt(fan_in)).
    Weights are stored transposed ([fan_in, fan_out]) for the kernel layout."""
    k1, k2, k3, k4 = jax.random.split(key, 4)
    lim1 = 1.0 / math.sqrt(in_size)
    lim2 = 1.0 / math.sqrt(mid_size)
    w1 = jax.random.uniform(k1, (in_size, mid_size), dtype, -lim1, lim1)
    b1 = jax.random.uniform(k2, (1, mid_size), dtype, -lim1, lim1)
    w2 = jax.random.uniform(k3, (mid_size, out_size), dtype, -lim2, lim2)
    b2 = jax.random.uniform(k4, (1, out_size), dtype, -lim2, lim2)
    return w1, b1, w2, b2


if __name__ == "__main__":
    # MLP(in_size=32, mid_size=64, out_size=32), input [batch=2, seq=8, in=32]
    in_size, mid_size, out_size = 32, 64, 32
    batch, seq = 2, 8

    key = jax.random.PRNGKey(0)
    kx, kp = jax.random.split(key)
    x = jax.random.normal(kx, (batch, seq, in_size), jnp.float32)
    w1, b1, w2, b2 = init_mlp_params(kp, in_size, mid_size, out_size)

    # One-time weight padding (kept out of the per-call hot path).
    params = pad_mlp_params(w1, b1, w2, b2)

    fwd = jax.jit(functools.partial(mlp_forward, out_size=out_size))
    y = jax.block_until_ready(fwd(x, *params))

    # Pure-JAX reference check of the forward semantics.
    ref = jnp.maximum(x @ w1 + b1[0], 0.0) @ w2 + b2[0]
    assert y.shape == (batch, seq, out_size)
    assert jnp.allclose(y, ref, atol=1e-5, rtol=1e-5)

    print("KERNEL_OK")
</pallas_src>

<mosaic_0001>
module attributes {stable_mosaic.version = 11 : i64} {
  func.func @_mlp_kernel(%arg0: i32, %arg1: i32, %arg2: memref<8x128xf32, #tpu.memory_space<vmem>>, %arg3: memref<128x128xf32, #tpu.memory_space<vmem>>, %arg4: memref<1x128xf32, #tpu.memory_space<vmem>>, %arg5: memref<128x128xf32, #tpu.memory_space<vmem>>, %arg6: memref<1x128xf32, #tpu.memory_space<vmem>>, %arg7: memref<8x128xf32, #tpu.memory_space<vmem>>, %arg8: memref<8x128xf32, #tpu.memory_space<vmem>>) attributes {dimension_semantics = [#tpu.dimension_semantics<parallel>, #tpu.dimension_semantics<arbitrary>], iteration_bounds = array<i64: 2, 1>, scalar_prefetch = 0 : i64, scratch_operands = 1 : i64, tpu.core_type = #tpu.core_type<tc>, window_params = [{transform_indices = @transform_0, window_bounds = array<i64: 8, 128>}, {pipeline_mode = #tpu.pipeline_mode<synchronous>, transform_indices = @transform_1, window_bounds = array<i64: 128, 128>}, {pipeline_mode = #tpu.pipeline_mode<synchronous>, transform_indices = @transform_2, window_bounds = array<i64: 1, 128>}, {pipeline_mode = #tpu.pipeline_mode<synchronous>, transform_indices = @transform_3, window_bounds = array<i64: 128, 128>}, {pipeline_mode = #tpu.pipeline_mode<synchronous>, transform_indices = @transform_4, window_bounds = array<i64: 1, 128>}, {transform_indices = @transform_5, window_bounds = array<i64: 8, 128>}]} {
    %c0_i32 = arith.constant 0 : i32
    %0 = arith.cmpi eq, %arg1, %c0_i32 : i32
    %1 = arith.extui %0 : i1 to i32
    %c0_i32_0 = arith.constant 0 : i32
    %2 = arith.cmpi ne, %1, %c0_i32_0 : i32
    scf.if %2 {
      %cst_16 = arith.constant 0.000000e+00 : f32
      %19 = vector.broadcast %cst_16 : f32 to vector<8x128xf32>
      %c0_17 = arith.constant 0 : index
      %c0_18 = arith.constant 0 : index
      %20 = vector.load %arg8[%c0_17, %c0_18] : memref<8x128xf32, #tpu.memory_space<vmem>>, vector<8x128xf32>
      tpu.vector_store %arg8[%c0_17, %c0_18], %19 {strides = array<i32>} : memref<8x128xf32, #tpu.memory_space<vmem>>, vector<8x128xf32>,
    } else {
    }
    %c0 = arith.constant 0 : index
    %c0_1 = arith.constant 0 : index
    %3 = vector.load %arg2[%c0, %c0_1] : memref<8x128xf32, #tpu.memory_space<vmem>>, vector<8x128xf32>
    %c0_2 = arith.constant 0 : index
    %c0_3 = arith.constant 0 : index
    %4 = vector.load %arg3[%c0_2, %c0_3] : memref<128x128xf32, #tpu.memory_space<vmem>>, vector<128x128xf32>
    %cst = arith.constant dense<0.000000e+00> : vector<8x128xf32>
    %5 = tpu.matmul %3, %4, %cst {dimension_numbers = #tpu.dot_dimension_numbers<[1], [0], [0], [1], [0, 0, 1, 1], [], []>} : vector<8x128xf32>, vector<128x128xf32>, vector<8x128xf32> -> vector<8x128xf32>
    %c0_4 = arith.constant 0 : index
    %c0_5 = arith.constant 0 : index
    %6 = vector.load %arg4[%c0_4, %c0_5] : memref<1x128xf32, #tpu.memory_space<vmem>>, vector<1x128xf32>
    %7 = vector.broadcast %6 : vector<1x128xf32> to vector<8x128xf32>
    %8 = arith.addf %5, %7 : vector<8x128xf32>
    %cst_6 = arith.constant 0.000000e+00 : f32
    %9 = vector.broadcast %cst_6 : f32 to vector<8x128xf32>
    %10 = arith.maximumf %8, %9 : vector<8x128xf32>
    %c0_7 = arith.constant 0 : index
    %c0_8 = arith.constant 0 : index
    %11 = vector.load %arg8[%c0_7, %c0_8] : memref<8x128xf32, #tpu.memory_space<vmem>>, vector<8x128xf32>
    %c0_9 = arith.constant 0 : index
    %c0_10 = arith.constant 0 : index
    %12 = vector.load %arg5[%c0_9, %c0_10] : memref<128x128xf32, #tpu.memory_space<vmem>>, vector<128x128xf32>
    %cst_11 = arith.constant dense<0.000000e+00> : vector<8x128xf32>
    %13 = tpu.matmul %10, %12, %cst_11 {dimension_numbers = #tpu.dot_dimension_numbers<[1], [0], [0], [1], [0, 0, 1, 1], [], []>} : vector<8x128xf32>, vector<128x128xf32>, vector<8x128xf32> -> vector<8x128xf32>
    %14 = arith.addf %11, %13 : vector<8x128xf32>
    %c0_12 = arith.constant 0 : index
    %c0_13 = arith.constant 0 : index
    %15 = vector.load %arg8[%c0_12, %c0_13] : memref<8x128xf32, #tpu.memory_space<vmem>>, vector<8x128xf32>
    tpu.vector_store %arg8[%c0_12, %c0_13], %14 {strides = array<i32>} : memref<8x128xf32, #tpu.memory_space<vmem>>, vector<8x128xf32>,
    %c0_i32_14 = arith.constant 0 : i32
    %16 = arith.cmpi eq, %arg1, %c0_i32_14 : i32
    %17 = arith.extui %16 : i1 to i32
    %c0_i32_15 = arith.constant 0 : i32
    %18 = arith.cmpi ne, %17, %c0_i32_15 : i32
    scf.if %18 {
      %c0_16 = arith.constant 0 : index
      %c0_17 = arith.constant 0 : index
      %19 = vector.load %arg8[%c0_16, %c0_17] : memref<8x128xf32, #tpu.memory_space<vmem>>, vector<8x128xf32>
      %c0_18 = arith.constant 0 : index
      %c0_19 = arith.constant 0 : index
      %20 = vector.load %arg6[%c0_18, %c0_19] : memref<1x128xf32, #tpu.memory_space<vmem>>, vector<1x128xf32>
      %21 = vector.broadcast %20 : vector<1x128xf32> to vector<8x128xf32>
      %22 = arith.addf %19, %21 : vector<8x128xf32>
      %c0_20 = arith.constant 0 : index
      %c0_21 = arith.constant 0 : index
      %23 = vector.load %arg7[%c0_20, %c0_21] : memref<8x128xf32, #tpu.memory_space<vmem>>, vector<8x128xf32>
      tpu.vector_store %arg7[%c0_20, %c0_21], %22 {strides = array<i32>} : memref<8x128xf32, #tpu.memory_space<vmem>>, vector<8x128xf32>,
    } else {
    }
    return
  }
  func.func @transform_0(%arg0: i32, %arg1: i32) -> (i32, i32) {
    %c0_i32 = arith.constant 0 : i32
    %c0_i32_0 = arith.constant 0 : i32
    return %arg0, %c0_i32 : i32, i32
  }
  func.func @transform_1(%arg0: i32, %arg1: i32) -> (i32, i32) {
    %c0_i32 = arith.constant 0 : i32
    %c0_i32_0 = arith.constant 0 : i32
    return %c0_i32, %arg1 : i32, i32
  }
  func.func @transform_2(%arg0: i32, %arg1: i32) -> (i32, i32) {
    %c0_i32 = arith.constant 0 : i32
    %c0_i32_0 = arith.constant 0 : i32
    return %c0_i32, %arg1 : i32, i32
  }
  func.func @transform_3(%arg0: i32, %arg1: i32) -> (i32, i32) {
    %c0_i32 = arith.constant 0 : i32
    %c0_i32_0 = arith.constant 0 : i32
    return %arg1, %c0_i32 : i32, i32
  }
  func.func @transform_4(%arg0: i32, %arg1: i32) -> (i32, i32) {
    %c0_i32 = arith.constant 0 : i32
    %c0_i32_0 = arith.constant 0 : i32
    %c0_i32_1 = arith.constant 0 : i32
    return %c0_i32, %c0_i32_0 : i32, i32
  }
  func.func @transform_5(%arg0: i32, %arg1: i32) -> (i32, i32) {
    %c0_i32 = arith.constant 0 : i32
    %c0_i32_0 = arith.constant 0 : i32
    return %arg0, %c0_i32 : i32, i32
  }
}

</mosaic_0001>

<llo_original>
// kernel: mlp_forward.1
$region0: #{mlp_forward.1}
  #allocation0 [shape = 'u32[]', space=smem, size = 0x4, offset = 0x4, fixed_abs, tag = 'smem constant byte address 0x4 - core index']
  #allocation1 [shape = 'u32[72,128]{1,0:T(1,128)}', space=vmem, size = 0x9000, scoped, tag = 'internal scratch']
  #allocation2 [shape = 'f32[8,128]{1,0:T(8,128)}', space=vmem, size = 0x1000, scoped, tag = 'scratch operand']
  %s0 = inlined_call_operand.vmem [shape: f32[16,128], index: 0, kind: input, shape index: {}]
  %s1 = inlined_call_operand.hbm [shape: f32[128,128], index: 1, kind: input, shape index: {}]
  %s2 = inlined_call_operand.vmem [shape: f32[1,128], index: 2, kind: input, shape index: {}]
  %s3 = inlined_call_operand.hbm [shape: f32[128,128], index: 3, kind: input, shape index: {}]
  %s4 = inlined_call_operand.vmem [shape: f32[1,128], index: 4, kind: input, shape index: {}]
  %s5 = inlined_call_operand.vmem [shape: f32[16,128], index: 5, kind: output, shape index: {}]
  %s6 = sld [smem:[#allocation0]]
  $region69: #{mlp_forward.1} parent=0
    _
  %s8 = ssub.s32 1, %s6
  %s9 = scalar_select 0, %s8, %s6
  $region1: #{mlp_forward.1} parent=0
    #allocation3 [shape = 'u8[65536]{0}', space=vmem, size = 0x10000, scoped, tag = 'input window, operand 1, single buffered']
    #allocation4 [shape = 's32[2]{0}', space=sflag, size = 0x8, scoped, tag = 'scoped memory for mlp_forward.1']
    #allocation5 [shape = 'u8[65536]{0}', space=vmem, size = 0x10000, scoped, tag = 'input window, operand 3, single buffered']
    #allocation6 [shape = 's32[1]{0}', space=sflag, size = 0x4, scoped, tag = 'scoped memory for mlp_forward.1']
    %10 = vsyncpa [#allocation4], 0
    %11 = vsyncpa [#allocation6], 0
    loop: start=0, step=1, limit=4
    $region2: #{mlp_forward.1} parent=1 // loop_pre_header
      _
    $region3: #{mlp_forward.1} parent=1 // loop_header
      %s13 = sphi 0, %s17
      %p14 = scmp.ge.s32.totalorder %s13, 4
      %s20 = sphi 0, %s32
      %s21 = sphi 0, %s28
      %s22 = sphi 0, %s20
      %s23 = sphi 0, %s21
      %s24 = sphi 0, %s22
      %s25 = sphi 0, %s23
      %s35 = sphi 0, %s37
      %s38 = sphi 0, %s35
      %s39 = sphi 0, %s38
      %s55 = sphi 0, %s39
      %s61 = sphi 0, %s63
      %s64 = sphi 0, %s61
      %s65 = sphi 0, %s64
      %s81 = sphi 0, %s65
      %s87 = sphi 0, %s89
      %s90 = sphi 0, %s87
      %s91 = sphi 0, %s90
      %s107 = sphi 0, %s91
      %s113 = sphi 0, %s115
      %s116 = sphi 0, %s113
      %s117 = sphi 0, %s116
      %s133 = sphi 0, %s117
      %s137 = sphi 0, %s137
      %s139 = sphi 0, %s137
      %s140 = sphi 0, %s139
      %s154 = sphi 0, %s140
      %s160 = sphi 0, %s162
      %s163 = sphi 0, %s160
      %s164 = sphi 0, %s163
      %s180 = sphi 0, %s164
    $region4: #{mlp_forward.1} parent=1 // loop_header_branch
      %16 = sbr.rel (%p14) target = $region8
    $region5: #{mlp_forward.1} parent=1 // loop_body
      %s18 = ssub.s32 %s13, 1
      %s19 = ssub.s32 %s13, 2
      %s26 = sadd.s32 1, %s21
      %p27 = scmp.ge.s32.totalorder %s26, 1
      %s28 = scalar_select %p27, 0, %s26
      %s29 = sadd.s32 1, %s20
      %s30 = scalar_select %p27, %s29, %s20
      %p31 = scmp.ge.s32.totalorder %s30, 2
      %s32 = scalar_select %p31, 0, %s30
      %s33 = ssub.s32 %s20, %s32
      %p34 = scmp.eq.s32.totalorder %s33, 0
      %s36 = sadd.s32 %s35, 1
      %s37 = scalar_select %p34, %s35, %s36
      %p40 = pneg %p34
      %p41 = scmp.eq.s32.totalorder %s13, 1
      %p42 = por %p40, %p41
      %p43 = scmp.ne.s32.totalorder %s35, %s38
      %p44 = scmp.eq.s32.totalorder %s13, 0
      %p45 = por %p43, %p44
      %p46 = scmp.ne.s32.totalorder %s35, %s38
      %p47 = scmp.eq.s32.totalorder %s18, 1
      %p48 = por %p46, %p47
      %p49 = scmp.ne.s32.totalorder %s38, %s39
      %p50 = scmp.eq.s32.totalorder %s18, 0
      %p51 = por %p49, %p50
      %p52 = scmp.ne.s32.totalorder %s38, %s39
      %p53 = scmp.eq.s32.totalorder %s19, 1
      %p54 = por %p52, %p53
      %p56 = scmp.ne.s32.totalorder %s39, %s55
      %p57 = scmp.eq.s32.totalorder %s19, 0
      %p58 = por %p56, %p57
      %s59 = ssub.s32 %s21, %s28
      %p60 = scmp.eq.s32.totalorder %s59, 0
      %s62 = sadd.s32 %s61, 1
      %s63 = scalar_select %p60, %s61, %s62
      %p66 = pneg %p60
      %p67 = scmp.eq.s32.totalorder %s13, 1
      %p68 = por %p66, %p67
      %p69 = scmp.ne.s32.totalorder %s61, %s64
      %p70 = scmp.eq.s32.totalorder %s13, 0
      %p71 = por %p69, %p70
      %p72 = scmp.ne.s32.totalorder %s61, %s64
      %p73 = scmp.eq.s32.totalorder %s18, 1
      %p74 = por %p72, %p73
      %p75 = scmp.ne.s32.totalorder %s64, %s65
      %p76 = scmp.eq.s32.totalorder %s18, 0
      %p77 = por %p75, %p76
      %p78 = scmp.ne.s32.totalorder %s64, %s65
      %p79 = scmp.eq.s32.totalorder %s19, 1
      %p80 = por %p78, %p79
      %p82 = scmp.ne.s32.totalorder %s65, %s81
      %p83 = scmp.eq.s32.totalorder %s19, 0
      %p84 = por %p82, %p83
      %s85 = ssub.s32 %s21, %s28
      %p86 = scmp.eq.s32.totalorder %s85, 0
      %s88 = sadd.s32 %s87, 1
      %s89 = scalar_select %p86, %s87, %s88
      %p92 = pneg %p86
      %p93 = scmp.eq.s32.totalorder %s13, 1
      %p94 = por %p92, %p93
      %p95 = scmp.ne.s32.totalorder %s87, %s90
      %p96 = scmp.eq.s32.totalorder %s13, 0
      %p97 = por %p95, %p96
      %p98 = scmp.ne.s32.totalorder %s87, %s90
      %p99 = scmp.eq.s32.totalorder %s18, 1
      %p100 = por %p98, %p99
      %p101 = scmp.ne.s32.totalorder %s90, %s91
      %p102 = scmp.eq.s32.totalorder %s18, 0
      %p103 = por %p101, %p102
      %p104 = scmp.ne.s32.totalorder %s90, %s91
      %p105 = scmp.eq.s32.totalorder %s19, 1
      %p106 = por %p104, %p105
      %p108 = scmp.ne.s32.totalorder %s91, %s107
      %p109 = scmp.eq.s32.totalorder %s19, 0
      %p110 = por %p108, %p109
      %s111 = ssub.s32 %s21, %s28
      %p112 = scmp.eq.s32.totalorder %s111, 0
      %s114 = sadd.s32 %s113, 1
      %s115 = scalar_select %p112, %s113, %s114
      %p118 = pneg %p112
      %p119 = scmp.eq.s32.totalorder %s13, 1
      %p120 = por %p118, %p119
      %p121 = scmp.ne.s32.totalorder %s113, %s116
      %p122 = scmp.eq.s32.totalorder %s13, 0
      %p123 = por %p121, %p122
      %p124 = scmp.ne.s32.totalorder %s113, %s116
      %p125 = scmp.eq.s32.totalorder %s18, 1
      %p126 = por %p124, %p125
      %p127 = scmp.ne.s32.totalorder %s116, %s117
      %p128 = scmp.eq.s32.totalorder %s18, 0
      %p129 = por %p127, %p128
      %p130 = scmp.ne.s32.totalorder %s116, %s117
      %p131 = scmp.eq.s32.totalorder %s19, 1
      %p132 = por %p130, %p131
      %p134 = scmp.ne.s32.totalorder %s117, %s133
      %p135 = scmp.eq.s32.totalorder %s19, 0
      %p136 = por %p134, %p135
      %s138 = sadd.s32 %s137, 1
      %p141 = scmp.eq.s32.totalorder %s13, 1
      %p142 = scmp.ne.s32.totalorder %s137, %s139
      %p143 = scmp.eq.s32.totalorder %s13, 0
      %p144 = por %p142, %p143
      %p145 = scmp.ne.s32.totalorder %s137, %s139
      %p146 = scmp.eq.s32.totalorder %s18, 1
      %p147 = por %p145, %p146
      %p148 = scmp.ne.s32.totalorder %s139, %s140
      %p149 = scmp.eq.s32.totalorder %s18, 0
      %p150 = por %p148, %p149
      %p151 = scmp.ne.s32.totalorder %s139, %s140
      %p152 = scmp.eq.s32.totalorder %s19, 1
      %p153 = por %p151, %p152
      %p155 = scmp.ne.s32.totalorder %s140, %s154
      %p156 = scmp.eq.s32.totalorder %s19, 0
      %p157 = por %p155, %p156
      %s158 = ssub.s32 %s20, %s32
      %p159 = scmp.eq.s32.totalorder %s158, 0
      %s161 = sadd.s32 %s160, 1
      %s162 = scalar_select %p159, %s160, %s161
      %p165 = pneg %p159
      %p166 = scmp.eq.s32.totalorder %s13, 1
      %p167 = por %p165, %p166
      %p168 = scmp.ne.s32.totalorder %s160, %s163
      %p169 = scmp.eq.s32.totalorder %s13, 0
      %p170 = por %p168, %p169
      %p171 = scmp.ne.s32.totalorder %s160, %s163
      %p172 = scmp.eq.s32.totalorder %s18, 1
      %p173 = por %p171, %p172
      %p174 = scmp.ne.s32.totalorder %s163, %s164
      %p175 = scmp.eq.s32.totalorder %s18, 0
      %p176 = por %p174, %p175
      %p177 = scmp.ne.s32.totalorder %s163, %s164
      %p178 = scmp.eq.s32.totalorder %s19, 1
      %p179 = por %p177, %p178
      %p181 = scmp.ne.s32.totalorder %s164, %s180
      %p182 = scmp.eq.s32.totalorder %s19, 0
      %p183 = por %p181, %p182
      %p184 = scmp.le.s32.totalorder 1, %s13
      %p185 = scmp.lt.s32.totalorder %s13, 3
      %p186 = pnand %p184, %p185
      %p187 = pneg %p186
      // Predicated region
      $region9: #{mlp_forward.1} parent=5 // pred_check
        _
      $region10: #{mlp_forward.1} parent=5 // pred_check_branch
        %189 = sbr.rel (%p186) target = $region12
      $region11: #{mlp_forward.1} parent=5 // pred_region
        %s190 = ssub.s32 %s13, 1
        // Predicated region
        $region13: #{mlp_forward.1} parent=11 // pred_check
          %p191 = pneg %p77
        $region14: #{mlp_forward.1} parent=11 // pred_check_branch
          %193 = sbr.rel (%p191) target = $region16
        $region15: #{mlp_forward.1} parent=11 // pred_region
          %195 = vsyncadd [#allocation4], 0
          %s196 = smul.addr %s23, 8
          %s197 = scalar_lea.hbm %s1, %s196
          %s198 = sshll.u32 %s197, 4
          %s199 = int_to_ptr.hbm [resolvable:$true] %s198
          %s200 = sshll.u32 [#allocation3], 4
          %s201 = int_to_ptr.vmem [resolvable:$true] %s200
          %206 = dma.hbm_to_vmem [thread:$0]  %s199, 2048, %s201, [#allocation4], 128, 128, 8
        $region16: #{mlp_forward.1} parent=11 // pred_fallthru
          _
        // Predicated region
        $region17: #{mlp_forward.1} parent=11 // pred_check
          %p207 = pneg %p103
        $region18: #{mlp_forward.1} parent=11 // pred_check_branch
          %209 = sbr.rel (%p207) target = $region20
        $region19: #{mlp_forward.1} parent=11 // pred_region
          %p210 = scmp.lt.s32.totalorder %s23, 0
          %s211 = scalar_select %p210, %s23, 0
          %s212 = scalar_lea.vmem %s2, %s211
        $region20: #{mlp_forward.1} parent=11 // pred_fallthru
          _
        // Predicated region
        $region21: #{mlp_forward.1} parent=11 // pred_check
          %p213 = pneg %p129
        $region22: #{mlp_forward.1} parent=11 // pred_check_branch
          %215 = sbr.rel (%p213) target = $region24
        $region23: #{mlp_forward.1} parent=11 // pred_region
          %s216 = smul.u32 16, %s23
          %218 = vsyncadd [#allocation6], 0
          %s219 = smul.addr %s216, 8
          %s220 = scalar_lea.hbm %s3, %s219
          %s221 = sshll.u32 %s220, 4
          %s222 = int_to_ptr.hbm [resolvable:$true] %s221
          %s223 = sshll.u32 [#allocation5], 4
          %s224 = int_to_ptr.vmem [resolvable:$true] %s223
          %229 = dma.hbm_to_vmem [thread:$0]  %s222, 2048, %s224, [#allocation6], 128, 128, 8
        $region24: #{mlp_forward.1} parent=11 // pred_fallthru
          _
        // Predicated region
        $region25: #{mlp_forward.1} parent=11 // pred_check
          %p230 = pneg %p150
        $region26: #{mlp_forward.1} parent=11 // pred_check_branch
          %232 = sbr.rel (%p230) target = $region28
        $region27: #{mlp_forward.1} parent=11 // pred_region
          _
        $region28: #{mlp_forward.1} parent=11 // pred_fallthru
          _
      $region12: #{mlp_forward.1} parent=5 // pred_fallthru
        _
      %p233 = scmp.lt.s32.totalorder %s13, 2
      // Predicated region
      $region29: #{mlp_forward.1} parent=5 // pred_check
        %p234 = pneg %p233
      $region30: #{mlp_forward.1} parent=5 // pred_check_branch
        %236 = sbr.rel (%p234) target = $region32
      $region31: #{mlp_forward.1} parent=5 // pred_region
        // Predicated region
        $region33: #{mlp_forward.1} parent=31 // pred_check
          %p237 = pneg %p45
        $region34: #{mlp_forward.1} parent=31 // pred_check_branch
          %239 = sbr.rel (%p237) target = $region36
        $region35: #{mlp_forward.1} parent=31 // pred_region
          %p240 = scmp.lt.s32.totalorder %s20, 1
          %s241 = scalar_select %p240, %s20, 1
          %s242 = smul.addr %s241, 8
          %s243 = scalar_lea.vmem %s0, %s242
        $region36: #{mlp_forward.1} parent=31 // pred_fallthru
          _
      $region32: #{mlp_forward.1} parent=5 // pred_fallthru
        _
      %p244 = scmp.le.s32.totalorder 1, %s13
      %p245 = scmp.lt.s32.totalorder %s13, 3
      %p246 = pnand %p244, %p245
      %p247 = pneg %p246
      // Predicated region
      $region37: #{mlp_forward.1} parent=5 // pred_check
        _
      $region38: #{mlp_forward.1} parent=5 // pred_check_branch
        %249 = sbr.rel (%p246) target = $region40
      $region39: #{mlp_forward.1} parent=5 // pred_region
        %s250 = ssub.s32 %s13, 1
        // Predicated region
        $region41: #{mlp_forward.1} parent=39 // pred_check
          %p251 = pneg %p77
        $region42: #{mlp_forward.1} parent=39 // pred_check_branch
          %253 = sbr.rel (%p251) target = $region44
        $region43: #{mlp_forward.1} parent=39 // pred_region
          %255 = dma.done [#allocation4], 2048
        $region44: #{mlp_forward.1} parent=39 // pred_fallthru
          _
        // Predicated region
        $region45: #{mlp_forward.1} parent=39 // pred_check
          %p256 = pneg %p129
        $region46: #{mlp_forward.1} parent=39 // pred_check_branch
          %258 = sbr.rel (%p256) target = $region48
        $region47: #{mlp_forward.1} parent=39 // pred_region
          %260 = dma.done [#allocation6], 2048
        $region48: #{mlp_forward.1} parent=39 // pred_fallthru
          _
        %p261 = scmp.lt.s32.totalorder %s22, 1
        %s262 = scalar_select %p261, %s22, 1
        %s263 = smul.addr %s262, 8
        %s264 = scalar_lea.vmem %s0, %s263
        %p265 = pneg %p51
        %p266 = pneg %p48
        %p267 = pneg %p77
        %p268 = pneg %p74
        %p269 = scmp.lt.s32.totalorder %s23, 0
        %s270 = scalar_select %p269, %s23, 0
        %s271 = scalar_lea.vmem %s2, %s270
        %p272 = pneg %p103
        %p273 = pneg %p100
        %p274 = pneg %p129
        %p275 = pneg %p126
        %p276 = pneg %p150
        %p277 = pneg %p147
        %p278 = pneg %p176
        %p279 = pneg %p173
        %p280 = scmp.lt.s32.totalorder %s22, 1
        %s281 = scalar_select %p280, %s22, 1
        %s282 = smul.addr %s281, 8
        %s283 = scalar_lea.vmem %s5, %s282
        %p284 = scmp.lt.s32.totalorder %s22, 1
        %s285 = scalar_select %p284, %s22, 1
        %s286 = smul.addr %s285, 8
        %s287 = scalar_lea.vmem %s0, %s286
        %p288 = scmp.lt.s32.totalorder %s23, 0
        %s289 = scalar_select %p288, %s23, 0
        %s290 = scalar_lea.vmem %s2, %s289
        %s291 = smul.u32 16, %s23
        %p292 = scmp.lt.s32.totalorder %s22, 1
        %s293 = scalar_select %p292, %s22, 1
        %s294 = smul.addr %s293, 8
        %s295 = scalar_lea.vmem %s5, %s294
        %p296 = scmp.eq.s32.totalorder %s23, 0
        // Predicated region
        $region49: #{mlp_forward.1} parent=39 // pred_check
          %p297 = pneg %p296
        $region50: #{mlp_forward.1} parent=39 // pred_check_branch
          %299 = sbr.rel (%p297) target = $region52
        $region51: #{mlp_forward.1} parent=39 // pred_region
          %300 = vst [vmem:[#allocation2] sm:$0xff] 0.0
        $region52: #{mlp_forward.1} parent=39 // pred_fallthru
          _
        %v301 = vld [vmem:[%s287] sm:$0xff]
        %v302 = vld [vmem:[#allocation3] sm:$0xff]
        %v303 = vld [vmem:[#allocation3 + $0x8] sm:$0xff]
        %v304 = vld [vmem:[#allocation3 + $0x10] sm:$0xff]
        %v305 = vld [vmem:[#allocation3 + $0x18] sm:$0xff]
        %v306 = vld [vmem:[#allocation3 + $0x20] sm:$0xff]
        %v307 = vld [vmem:[#allocation3 + $0x28] sm:$0xff]
        %v308 = vld [vmem:[#allocation3 + $0x30] sm:$0xff]
        %v309 = vld [vmem:[#allocation3 + $0x38] sm:$0xff]
        %v310 = vld [vmem:[#allocation3 + $0x40] sm:$0xff]
        %v311 = vld [vmem:[#allocation3 + $0x48] sm:$0xff]
        %v312 = vld [vmem:[#allocation3 + $0x50] sm:$0xff]
        %v313 = vld [vmem:[#allocation3 + $0x58] sm:$0xff]
        %v314 = vld [vmem:[#allocation3 + $0x60] sm:$0xff]
        %v315 = vld [vmem:[#allocation3 + $0x68] sm:$0xff]
        %v316 = vld [vmem:[#allocation3 + $0x70] sm:$0xff]
        %v317 = vld [vmem:[#allocation3 + $0x78] sm:$0xff]
        %v318 = vld [vmem:[%s290] sm:$0x1]
        %v320 = vperm.slane %v318, 0
        %322 = vmatpush.msra.mxu0 %v317
        %323 = vmatpush.msra.mxu0 %v316
        %324 = vmatpush.msra.mxu0 %v315
        %325 = vmatpush.msra.mxu0 %v314
        %326 = vmatpush.msra.mxu0 %v313
        %327 = vmatpush.msra.mxu0 %v312
        %328 = vmatpush.msra.mxu0 %v311
        %329 = vmatpush.msra.mxu0 %v310
        %330 = vmatpush.msra.mxu0 %v309
        %331 = vmatpush.msra.mxu0 %v308
        %332 = vmatpush.msra.mxu0 %v307
        %333 = vmatpush.msra.mxu0 %v306
        %334 = vmatpush.msra.mxu0 %v305
        %335 = vmatpush.msra.mxu0 %v304
        %336 = vmatpush.msra.mxu0 %v303
        %337 = vmatpush.msra.mxu0 %v302
        %338 = vmatmul.f32.gmra.mxu0 %v301
        %v339 = vpop.f32.mrf.mxu0
        %v340 = vadd.f32 %v320, %v339
        %341 = vdwg.mxu0
        %v342 = vmax.f32 %v340, 0.0
        %v343 = vld [vmem:[#allocation2] sm:$0xff]
        %v344 = vld [vmem:[#allocation5] sm:$0xff]
        %v345 = vld [vmem:[#allocation5 + $0x8] sm:$0xff]
        %v346 = vld [vmem:[#allocation5 + $0x10] sm:$0xff]
        %v347 = vld [vmem:[#allocation5 + $0x18] sm:$0xff]
        %v348 = vld [vmem:[#allocation5 + $0x20] sm:$0xff]
        %v349 = vld [vmem:[#allocation5 + $0x28] sm:$0xff]
        %v350 = vld [vmem:[#allocation5 + $0x30] sm:$0xff]
        %v351 = vld [vmem:[#allocation5 + $0x38] sm:$0xff]
        %v352 = vld [vmem:[#allocation5 + $0x40] sm:$0xff]
        %v353 = vld [vmem:[#allocation5 + $0x48] sm:$0xff]
        %v354 = vld [vmem:[#allocation5 + $0x50] sm:$0xff]
        %v355 = vld [vmem:[#allocation5 + $0x58] sm:$0xff]
        %v356 = vld [vmem:[#allocation5 + $0x60] sm:$0xff]
        %v357 = vld [vmem:[#allocation5 + $0x68] sm:$0xff]
        %v358 = vld [vmem:[#allocation5 + $0x70] sm:$0xff]
        %v359 = vld [vmem:[#allocation5 + $0x78] sm:$0xff]
        %360 = vmatpush.msra.mxu0 %v359
        %361 = vmatpush.msra.mxu0 %v358
        %362 = vmatpush.msra.mxu0 %v357
        %363 = vmatpush.msra.mxu0 %v356
        %364 = vmatpush.msra.mxu0 %v355
        %365 = vmatpush.msra.mxu0 %v354
        %366 = vmatpush.msra.mxu0 %v353
        %367 = vmatpush.msra.mxu0 %v352
        %368 = vmatpush.msra.mxu0 %v351
        %369 = vmatpush.msra.mxu0 %v350
        %370 = vmatpush.msra.mxu0 %v349
        %371 = vmatpush.msra.mxu0 %v348
        %372 = vmatpush.msra.mxu0 %v347
        %373 = vmatpush.msra.mxu0 %v346
        %374 = vmatpush.msra.mxu0 %v345
        %375 = vmatpush.msra.mxu0 %v344
        %376 = vmatmul.f32.gmra.mxu0 %v342
        %v377 = vpop.f32.mrf.mxu0
        %v378 = vadd.f32 0.0, %v377
        %379 = vdwg.mxu0
        %v380 = vadd.f32 %v343, %v378
        %381 = vst [vmem:[#allocation2] sm:$0xff] %v380
        // Predicated region
        $region53: #{mlp_forward.1} parent=39 // pred_check
          %p382 = pneg %p296
        $region54: #{mlp_forward.1} parent=39 // pred_check_branch
          %384 = sbr.rel (%p382) target = $region56
        $region55: #{mlp_forward.1} parent=39 // pred_region
          %v385 = vld [vmem:[#allocation2] sm:$0xff]
          %v386 = vld [vmem:[%s4] sm:$0x1]
          %v388 = vperm.slane %v386, 0
          %v390 = vadd.f32 %v385, %v388
          %391 = vst [vmem:[%s295] sm:$0xff] %v390
        $region56: #{mlp_forward.1} parent=39 // pred_fallthru
          _
        %p392 = scmp.lt.s32.totalorder %s22, 1
        %s393 = scalar_select %p392, %s22, 1
        %s394 = smul.addr %s393, 8
        %s395 = scalar_lea.vmem %s5, %s394
        // Predicated region
        $region57: #{mlp_forward.1} parent=39 // pred_check
          %p396 = pneg %p173
        $region58: #{mlp_forward.1} parent=39 // pred_check_branch
          %398 = sbr.rel (%p396) target = $region60
        $region59: #{mlp_forward.1} parent=39 // pred_region
          _
        $region60: #{mlp_forward.1} parent=39 // pred_fallthru
          _
      $region40: #{mlp_forward.1} parent=5 // pred_fallthru
        _
      %p399 = scmp.le.s32.totalorder 2, %s13
      // Predicated region
      $region61: #{mlp_forward.1} parent=5 // pred_check
        %p400 = pneg %p399
      $region62: #{mlp_forward.1} parent=5 // pred_check_branch
        %402 = sbr.rel (%p400) target = $region64
      $region63: #{mlp_forward.1} parent=5 // pred_region
        %s403 = ssub.s32 %s13, 2
        // Predicated region
        $region65: #{mlp_forward.1} parent=63 // pred_check
          %p404 = pneg %p179
        $region66: #{mlp_forward.1} parent=63 // pred_check_branch
          %406 = sbr.rel (%p404) target = $region68
        $region67: #{mlp_forward.1} parent=63 // pred_region
          %p407 = scmp.lt.s32.totalorder %s24, 1
          %s408 = scalar_select %p407, %s24, 1
          %s409 = smul.addr %s408, 8
          %s410 = scalar_lea.vmem %s5, %s409
        $region68: #{mlp_forward.1} parent=63 // pred_fallthru
          _
      $region64: #{mlp_forward.1} parent=5 // pred_fallthru
        _
    $region6: #{mlp_forward.1} parent=1 // loop_footer
      %s17 = sadd.s32 1, %s13
    $region7: #{mlp_forward.1} parent=1 // loop_footer_branch
      %12 = sbr.rel target = $region3
    $region8: #{mlp_forward.1} parent=1 // loop_exit
      _
    %411 = vsyncpa [#allocation4], 1
    %s412 = scalar_lea.sflag [#allocation4], 1
    %413 = vsyncpa %s412, 1
    %414 = vsyncpa [#allocation6], 1

</llo_original>
